<compile_context>
chip_gen: v6e
topology: v6e:2x2x1
jax: 0.10.0
libtpu: 0.0.40
codegen_flags: <defaults>
</compile_context>

<pallas_src>
import functools
import math

import jax
import jax.numpy as jnp
from jax import lax
from jax.experimental import pallas as pl
from jax.experimental.pallas import tpu as pltpu


def smooth_relu(x):
    # smooth ReLU used with ICNN in the Neural Stochastic Control repo.
    d = 0.01
    return jnp.where(x <= d,
                     jnp.where(x <= 0.0, jnp.zeros_like(x), x * x / (2.0 * d)),
                     x - d / 2.0)


# ---------------------------------------------------------------------------
# Parameter preparation -- hoisted out of the forward pass.  Call once per
# parameter set and reuse the result for every forward call.
# ---------------------------------------------------------------------------
def prepare_icnn_params(ws, bs, us, compute_dtype=jnp.bfloat16):
    """Returns (w_all, b_all, u_sp): stacked weights (compute_dtype), stacked
    f32 biases, and softplus(U_i) in compute_dtype (stable jax.nn.softplus)."""
    w_all = jnp.concatenate([w.astype(jnp.float32) for w in ws], axis=0)
    w_all = w_all.astype(compute_dtype)                         # (sum L_i, d)
    b_all = jnp.concatenate([b.astype(jnp.float32) for b in bs], axis=0)  # (sum L_i, 1) f32
    u_sp = tuple(jax.nn.softplus(u.astype(jnp.float32)).astype(compute_dtype)
                 for u in us)
    return w_all, b_all, u_sp


# ---------------------------------------------------------------------------
# Kernel
# ---------------------------------------------------------------------------
def _make_icnn_kernel(layer_sizes, activation_fn, compute_dtype):
    """Kernel refs: x (Tb, d), W_all, b_all, softplus(U_1..n-1), out (L_last, Tb),
    pre-activation VMEM scratch (sum L_i, Tb)."""
    n = len(layer_sizes)
    offs = [0]
    for L in layer_sizes:
        offs.append(offs[-1] + L)

    def kernel(x_ref, w_all_ref, b_all_ref, *rest):
        u_refs = rest[:n - 1]
        out_ref = rest[n - 1]
        pre_ref = rest[n]                     # VMEM scratch (total_l, Tb) f32

        # One stacked matmul covers W_i @ x^T (+ b_i) for every layer.  x is
        # the streamed (Tb, d) batch tile; contracting dim 1 of both operands
        # (trans_b, MXU-native) avoids any wrapper-side transpose of x.
        pre_ref[...] = lax.dot_general(
            w_all_ref[...], x_ref[...],
            dimension_numbers=(((1,), (1,)), ((), ())),
            preferred_element_type=jnp.float32) + b_all_ref[...]

        # Bias adds / activations stay f32; only matmul operands are bf16.
        z = activation_fn(pre_ref[offs[0]:offs[1], :])
        for i in range(1, n):
            uz = jnp.dot(u_refs[i - 1][...], z.astype(compute_dtype),
                         preferred_element_type=jnp.float32)
            z = activation_fn(pre_ref[offs[i]:offs[i + 1], :] + uz)
        out_ref[...] = z.astype(out_ref.dtype)

    return kernel


def _pick_batch_tile(batch):
    """Lane-dense tile (multiple of 128); prefer >= 2 tiles so the v7x megacore
    can split the grid across both TensorCores, with bounded tail padding."""
    if batch <= 128:
        return 128
    return int(min(2048, 128 * pl.cdiv(pl.cdiv(batch, 2), 128)))


def icnn_forward(x, w_all, b_all, u_sp, *, activation_fn=smooth_relu,
                 batch_tile=None):
    """x: (batch, d).  (w_all, b_all, u_sp) from prepare_icnn_params.
    Returns z of shape (layer_sizes[-1], batch) in float32."""
    # TODO(synk): PyTorch's `len(x.shape) < 2` (unsqueeze(0)) branch is not
    # implemented; only the batched 2-D path is.
    assert x.ndim == 2, "only the batched (batch, d) path is implemented"
    batch, d = x.shape
    total_l, d_w = w_all.shape
    assert d_w == d

    # Per-layer sizes are recovered from the (static) softplus(U) shapes.
    if len(u_sp) == 0:
        layer_sizes = (total_l,)
    else:
        layer_sizes = (u_sp[0].shape[1],) + tuple(u.shape[0] for u in u_sp)
    assert sum(layer_sizes) == total_l
    l_last = layer_sizes[-1]

    compute_dtype = w_all.dtype

    tb = _pick_batch_tile(batch) if batch_tile is None else int(batch_tile)
    num_tiles = int(pl.cdiv(batch, tb))
    padded = num_tiles * tb

    # x streams as (Tb, d) tiles in compute_dtype (bf16 by default: half the
    # per-tile DMA bytes).  Zero-padded tail rows flow through independently
    # (no cross-column reductions) and are sliced off only when needed.
    xc = x.astype(compute_dtype)
    if padded != batch:
        xc = jnp.pad(xc, ((0, padded - batch), (0, 0)))

    in_specs = [
        pl.BlockSpec((tb, d), lambda i: (i, 0)),        # batch tile streams
        pl.BlockSpec((total_l, d), lambda i: (0, 0)),   # resident weights
        pl.BlockSpec((total_l, 1), lambda i: (0, 0)),   # resident biases (f32)
    ]
    in_specs += [pl.BlockSpec(u.shape, lambda i: (0, 0)) for u in u_sp]

    out = pl.pallas_call(
        _make_icnn_kernel(layer_sizes, activation_fn, compute_dtype),
        out_shape=jax.ShapeDtypeStruct((l_last, padded), jnp.float32),
        grid_spec=pltpu.PrefetchScalarGridSpec(
            num_scalar_prefetch=0,
            grid=(num_tiles,),
            in_specs=in_specs,
            # (l_last, Tb) with Tb a multiple of 128 keeps output stores
            # lane-dense (unmasked vst) -- do NOT transpose to (batch, 1).
            out_specs=pl.BlockSpec((l_last, tb), lambda i: (0, i)),
            scratch_shapes=[pltpu.VMEM((total_l, tb), jnp.float32)],
        ),
        compiler_params=pltpu.CompilerParams(
            dimension_semantics=("parallel",)),
    )(xc, w_all, b_all, *u_sp)

    if padded != batch:
        out = out[:, :batch]
    return out


# ---------------------------------------------------------------------------
# Pure-JAX reference and init helpers
# ---------------------------------------------------------------------------
def _q(a, dtype):
    # Round values to `dtype` but keep them as f32 (exact in f32), so the
    # reference is immune to XLA precision/excess-precision choices.
    return a.astype(dtype).astype(jnp.float32)


def icnn_reference(x, ws, bs, us, activation_fn=smooth_relu,
                   operand_dtype=jnp.float32):
    """Same math as the PyTorch module; operand_dtype mirrors the kernel's
    matmul-operand rounding (bf16) when requested."""
    xt = _q(x, operand_dtype).T                                  # (d, batch)
    z = activation_fn(_q(ws[0], operand_dtype) @ xt + bs[0])
    for i in range(len(us)):
        u = _q(jax.nn.softplus(us[i]), operand_dtype)
        z = activation_fn(_q(ws[i + 1], operand_dtype) @ xt + bs[i + 1]
                          + u @ _q(z, operand_dtype))
    return z


def xavier_normal(key, shape):
    # nn.init.xavier_normal_ for 2-D tensors: fan_out = shape[0], fan_in = shape[1]
    fan_out, fan_in = shape[0], shape[1]
    std = math.sqrt(2.0 / (fan_in + fan_out))
    return std * jax.random.normal(key, shape, dtype=jnp.float32)


def init_icnn_params(key, input_shape, layer_sizes):
    d = input_shape[0]
    ws, bs, us = [], [], []
    keys = jax.random.split(key, 3 * len(layer_sizes))
    k = 0
    for i, L in enumerate(layer_sizes):
        ws.append(xavier_normal(keys[k], (L, d))); k += 1
        bs.append(xavier_normal(keys[k], (L, 1))); k += 1
        if i > 0:
            us.append(xavier_normal(keys[k], (L, layer_sizes[i - 1]))); k += 1
    return ws, bs, us


if __name__ == "__main__":
    key = jax.random.PRNGKey(0)
    k_param, k_x = jax.random.split(key)

    input_shape = (4,)            # state dimension
    layer_sizes = [32, 32, 1]     # ICNN hidden sizes -> scalar output per sample
    batch = 600                   # non-multiple of 128: exercises tail padding
                                  # and a >=2-tile grid (v7x megacore split)

    ws, bs, us = init_icnn_params(k_param, input_shape, layer_sizes)
    x = jax.random.normal(k_x, (batch, input_shape[0]), dtype=jnp.float32)

    # Parameter prep is hoisted: done once per parameter set, reused per call.
    w_all, b_all, u_sp = prepare_icnn_params(ws, bs, us,
                                             compute_dtype=jnp.bfloat16)

    fwd = jax.jit(functools.partial(icnn_forward, activation_fn=smooth_relu))
    z = jax.block_until_ready(fwd(x, w_all, b_all, u_sp))
    assert z.shape == (layer_sizes[-1], batch)

    # 1) Tight check against a reference that rounds matmul operands to bf16
    #    exactly like the kernel (f32 accumulation).
    z_matched = icnn_reference(x, ws, bs, us, smooth_relu,
                               operand_dtype=jnp.bfloat16)
    assert jnp.allclose(z, z_matched, atol=1e-2, rtol=1e-3), \
        float(jnp.max(jnp.abs(z - z_matched)))

    # 2) Loose check against the full-f32 PyTorch-equivalent math (bf16 matmul
    #    operands introduce a small, bounded deviation).
    z_f32 = icnn_reference(x, ws, bs, us, smooth_relu,
                           operand_dtype=jnp.float32)
    assert jnp.allclose(z, z_f32, atol=1e-1, rtol=1e-1), \
        float(jnp.max(jnp.abs(z - z_f32)))

    print("KERNEL_OK")
</pallas_src>

<mosaic_0001>
module attributes {stable_mosaic.version = 11 : i64} {
  func.func @kernel(%arg0: i32, %arg1: memref<384x4xbf16, #tpu.memory_space<vmem>>, %arg2: memref<65x4xbf16, #tpu.memory_space<vmem>>, %arg3: memref<65x1xf32, #tpu.memory_space<vmem>>, %arg4: memref<32x32xbf16, #tpu.memory_space<vmem>>, %arg5: memref<1x32xbf16, #tpu.memory_space<vmem>>, %arg6: memref<1x384xf32, #tpu.memory_space<vmem>>, %arg7: memref<65x384xf32, #tpu.memory_space<vmem>>) attributes {dimension_semantics = [#tpu.dimension_semantics<parallel>], iteration_bounds = array<i64: 2>, scalar_prefetch = 0 : i64, scratch_operands = 1 : i64, tpu.core_type = #tpu.core_type<tc>, window_params = [{transform_indices = @transform_0, window_bounds = array<i64: 384, 4>}, {pipeline_mode = #tpu.pipeline_mode<synchronous>, transform_indices = @transform_1, window_bounds = array<i64: 65, 4>}, {pipeline_mode = #tpu.pipeline_mode<synchronous>, transform_indices = @transform_2, window_bounds = array<i64: 65, 1>}, {pipeline_mode = #tpu.pipeline_mode<synchronous>, transform_indices = @transform_3, window_bounds = array<i64: 32, 32>}, {pipeline_mode = #tpu.pipeline_mode<synchronous>, transform_indices = @transform_4, window_bounds = array<i64: 1, 32>}, {transform_indices = @transform_5, window_bounds = array<i64: 1, 384>}]} {
    %c0 = arith.constant 0 : index
    %c0_0 = arith.constant 0 : index
    %0 = vector.load %arg2[%c0, %c0_0] : memref<65x4xbf16, #tpu.memory_space<vmem>>, vector<65x4xbf16>
    %c0_1 = arith.constant 0 : index
    %c0_2 = arith.constant 0 : index
    %1 = vector.load %arg1[%c0_1, %c0_2] : memref<384x4xbf16, #tpu.memory_space<vmem>>, vector<384x4xbf16>
    %cst = arith.constant dense<0.000000e+00> : vector<65x384xf32>
    %2 = tpu.matmul %0, %1, %cst {dimension_numbers = #tpu.dot_dimension_numbers<[1], [1], [0], [0], [0, 0, 1, 0], [], []>} : vector<65x4xbf16>, vector<384x4xbf16>, vector<65x384xf32> -> vector<65x384xf32>
    %c0_3 = arith.constant 0 : index
    %c0_4 = arith.constant 0 : index
    %3 = vector.load %arg3[%c0_3, %c0_4] : memref<65x1xf32, #tpu.memory_space<vmem>>, vector<65x1xf32>
    %4 = vector.broadcast %3 : vector<65x1xf32> to vector<65x384xf32>
    %5 = arith.addf %2, %4 : vector<65x384xf32>
    %c0_5 = arith.constant 0 : index
    %c0_6 = arith.constant 0 : index
    %6 = vector.load %arg7[%c0_5, %c0_6] : memref<65x384xf32, #tpu.memory_space<vmem>>, vector<65x384xf32>
    tpu.vector_store %arg7[%c0_5, %c0_6], %5 {strides = array<i32>} : memref<65x384xf32, #tpu.memory_space<vmem>>, vector<65x384xf32>,
    %c0_7 = arith.constant 0 : index
    %c0_8 = arith.constant 0 : index
    %7 = vector.load %arg7[%c0_7, %c0_8] : memref<65x384xf32, #tpu.memory_space<vmem>>, vector<32x384xf32>
    %cst_9 = arith.constant 0.00999999977 : f32
    %8 = vector.broadcast %cst_9 : f32 to vector<32x384xf32>
    %9 = arith.cmpf ole, %7, %8 : vector<32x384xf32>
    %cst_10 = arith.constant 0.000000e+00 : f32
    %10 = vector.broadcast %cst_10 : f32 to vector<32x384xf32>
    %11 = arith.cmpf ole, %7, %10 : vector<32x384xf32>
    %cst_11 = arith.constant 0.000000e+00 : f32
    %12 = vector.broadcast %cst_11 : f32 to vector<32x384xf32>
    %13 = arith.mulf %7, %7 : vector<32x384xf32>
    %cst_12 = arith.constant 2.000000e-02 : f32
    %14 = vector.broadcast %cst_12 : f32 to vector<32x384xf32>
    %15 = arith.divf %13, %14 : vector<32x384xf32>
    %16 = arith.select %11, %12, %15 : vector<32x384xi1>, vector<32x384xf32>
    %cst_13 = arith.constant 5.000000e-03 : f32
    %17 = vector.broadcast %cst_13 : f32 to vector<32x384xf32>
    %18 = arith.subf %7, %17 : vector<32x384xf32>
    %19 = arith.select %9, %16, %18 : vector<32x384xi1>, vector<32x384xf32>
    %c0_14 = arith.constant 0 : index
    %c0_15 = arith.constant 0 : index
    %20 = vector.load %arg4[%c0_14, %c0_15] : memref<32x32xbf16, #tpu.memory_space<vmem>>, vector<32x32xbf16>
    %21 = arith.truncf %19 : vector<32x384xf32> to vector<32x384xbf16>
    %cst_16 = arith.constant dense<0.000000e+00> : vector<32x384xf32>
    %22 = tpu.matmul %20, %21, %cst_16 {dimension_numbers = #tpu.dot_dimension_numbers<[1], [0], [0], [1], [0, 0, 1, 1], [], []>} : vector<32x32xbf16>, vector<32x384xbf16>, vector<32x384xf32> -> vector<32x384xf32>
    %c32 = arith.constant 32 : index
    %c0_17 = arith.constant 0 : index
    %23 = vector.load %arg7[%c32, %c0_17] : memref<65x384xf32, #tpu.memory_space<vmem>>, vector<32x384xf32>
    %24 = arith.addf %23, %22 : vector<32x384xf32>
    %cst_18 = arith.constant 0.00999999977 : f32
    %25 = vector.broadcast %cst_18 : f32 to vector<32x384xf32>
    %26 = arith.cmpf ole, %24, %25 : vector<32x384xf32>
    %cst_19 = arith.constant 0.000000e+00 : f32
    %27 = vector.broadcast %cst_19 : f32 to vector<32x384xf32>
    %28 = arith.cmpf ole, %24, %27 : vector<32x384xf32>
    %cst_20 = arith.constant 0.000000e+00 : f32
    %29 = vector.broadcast %cst_20 : f32 to vector<32x384xf32>
    %30 = arith.mulf %24, %24 : vector<32x384xf32>
    %cst_21 = arith.constant 2.000000e-02 : f32
    %31 = vector.broadcast %cst_21 : f32 to vector<32x384xf32>
    %32 = arith.divf %30, %31 : vector<32x384xf32>
    %33 = arith.select %28, %29, %32 : vector<32x384xi1>, vector<32x384xf32>
    %cst_22 = arith.constant 5.000000e-03 : f32
    %34 = vector.broadcast %cst_22 : f32 to vector<32x384xf32>
    %35 = arith.subf %24, %34 : vector<32x384xf32>
    %36 = arith.select %26, %33, %35 : vector<32x384xi1>, vector<32x384xf32>
    %c0_23 = arith.constant 0 : index
    %c0_24 = arith.constant 0 : index
    %37 = vector.load %arg5[%c0_23, %c0_24] : memref<1x32xbf16, #tpu.memory_space<vmem>>, vector<1x32xbf16>
    %38 = arith.truncf %36 : vector<32x384xf32> to vector<32x384xbf16>
    %cst_25 = arith.constant dense<0.000000e+00> : vector<1x384xf32>
    %39 = tpu.matmul %37, %38, %cst_25 {dimension_numbers = #tpu.dot_dimension_numbers<[1], [0], [0], [1], [0, 0, 1, 1], [], []>} : vector<1x32xbf16>, vector<32x384xbf16>, vector<1x384xf32> -> vector<1x384xf32>
    %c64 = arith.constant 64 : index
    %c0_26 = arith.constant 0 : index
    %40 = vector.load %arg7[%c64, %c0_26] : memref<65x384xf32, #tpu.memory_space<vmem>>, vector<1x384xf32>
    %41 = arith.addf %40, %39 : vector<1x384xf32>
    %cst_27 = arith.constant 0.00999999977 : f32
    %42 = vector.broadcast %cst_27 : f32 to vector<1x384xf32>
    %43 = arith.cmpf ole, %41, %42 : vector<1x384xf32>
    %cst_28 = arith.constant 0.000000e+00 : f32
    %44 = vector.broadcast %cst_28 : f32 to vector<1x384xf32>
    %45 = arith.cmpf ole, %41, %44 : vector<1x384xf32>
    %cst_29 = arith.constant 0.000000e+00 : f32
    %46 = vector.broadcast %cst_29 : f32 to vector<1x384xf32>
    %47 = arith.mulf %41, %41 : vector<1x384xf32>
    %cst_30 = arith.constant 2.000000e-02 : f32
    %48 = vector.broadcast %cst_30 : f32 to vector<1x384xf32>
    %49 = arith.divf %47, %48 : vector<1x384xf32>
    %50 = arith.select %45, %46, %49 : vector<1x384xi1>, vector<1x384xf32>
    %cst_31 = arith.constant 5.000000e-03 : f32
    %51 = vector.broadcast %cst_31 : f32 to vector<1x384xf32>
    %52 = arith.subf %41, %51 : vector<1x384xf32>
    %53 = arith.select %43, %50, %52 : vector<1x384xi1>, vector<1x384xf32>
    %c0_32 = arith.constant 0 : index
    %c0_33 = arith.constant 0 : index
    %54 = vector.load %arg6[%c0_32, %c0_33] : memref<1x384xf32, #tpu.memory_space<vmem>>, vector<1x384xf32>
    tpu.vector_store %arg6[%c0_32, %c0_33], %53 {strides = array<i32>} : memref<1x384xf32, #tpu.memory_space<vmem>>, vector<1x384xf32>,
    return
  }
  func.func @transform_0(%arg0: i32) -> (i32, i32) {
    %c0_i32 = arith.constant 0 : i32
    %c0_i32_0 = arith.constant 0 : i32
    return %arg0, %c0_i32 : i32, i32
  }
  func.func @transform_1(%arg0: i32) -> (i32, i32) {
    %c0_i32 = arith.constant 0 : i32
    %c0_i32_0 = arith.constant 0 : i32
    %c0_i32_1 = arith.constant 0 : i32
    return %c0_i32, %c0_i32_0 : i32, i32
  }
  func.func @transform_2(%arg0: i32) -> (i32, i32) {
    %c0_i32 = arith.constant 0 : i32
    %c0_i32_0 = arith.constant 0 : i32
    %c0_i32_1 = arith.constant 0 : i32
    return %c0_i32, %c0_i32_0 : i32, i32
  }
  func.func @transform_3(%arg0: i32) -> (i32, i32) {
    %c0_i32 = arith.constant 0 : i32
    %c0_i32_0 = arith.constant 0 : i32
    %c0_i32_1 = arith.constant 0 : i32
    return %c0_i32, %c0_i32_0 : i32, i32
  }
  func.func @transform_4(%arg0: i32) -> (i32, i32) {
    %c0_i32 = arith.constant 0 : i32
    %c0_i32_0 = arith.constant 0 : i32
    %c0_i32_1 = arith.constant 0 : i32
    return %c0_i32, %c0_i32_0 : i32, i32
  }
  func.func @transform_5(%arg0: i32) -> (i32, i32) {
    %c0_i32 = arith.constant 0 : i32
    %c0_i32_0 = arith.constant 0 : i32
    return %c0_i32, %arg0 : i32, i32
  }
}

</mosaic_0001>

<llo_original>
// kernel: icnn_forward.1
$region0: #{icnn_forward.1}
  #allocation0 [shape = 'u32[]', space=smem, size = 0x4, offset = 0x4, fixed_abs, tag = 'smem constant byte address 0x4 - core index']
  #allocation1 [shape = 'u32[144,128]{1,0:T(1,128)}', space=vmem, size = 0x12000, scoped, tag = 'internal scratch']
  #allocation2 [shape = 'f32[65,384]{1,0:T(8,128)}', space=vmem, size = 0x1b000, scoped, tag = 'scratch operand']
  %s0 = inlined_call_operand.vmem [shape: bf16[768,4], index: 0, kind: input, shape index: {}]
  %s1 = inlined_call_operand.vmem [shape: bf16[65,4], index: 1, kind: input, shape index: {}]
  %s2 = inlined_call_operand.vmem [shape: f32[65,1], index: 2, kind: input, shape index: {}]
  %s3 = inlined_call_operand.vmem [shape: bf16[32,32], index: 3, kind: input, shape index: {}]
  %s4 = inlined_call_operand.vmem [shape: bf16[1,32], index: 4, kind: input, shape index: {}]
  %s5 = inlined_call_operand.vmem [shape: f32[1,768], index: 5, kind: output, shape index: {}]
  %s6 = sld [smem:[#allocation0]]
  $region53: #{icnn_forward.1} parent=0
    _
  %s8 = ssub.s32 1, %s6
  %s9 = scalar_select 0, %s8, %s6
  loop: start=0, step=1, limit=4
  $region2: #{icnn_forward.1} parent=0 // loop_pre_header
    _
  $region3: #{icnn_forward.1} parent=0 // loop_header
    %s11 = sphi 0, %s15
    %p12 = scmp.ge.s32.totalorder %s11, 4
    %s21 = sphi 0, %s23
    %s24 = sphi 0, %s21
    %s25 = sphi 0, %s24
    %s41 = sphi 0, %s25
    %s45 = sphi 0, %s45
    %s47 = sphi 0, %s45
    %s48 = sphi 0, %s47
    %s62 = sphi 0, %s48
    %s66 = sphi 0, %s66
    %s68 = sphi 0, %s66
    %s69 = sphi 0, %s68
    %s83 = sphi 0, %s69
    %s87 = sphi 0, %s87
    %s89 = sphi 0, %s87
    %s90 = sphi 0, %s89
    %s104 = sphi 0, %s90
    %s108 = sphi 0, %s108
    %s110 = sphi 0, %s108
    %s111 = sphi 0, %s110
    %s125 = sphi 0, %s111
    %s131 = sphi 0, %s133
    %s134 = sphi 0, %s131
    %s135 = sphi 0, %s134
    %s151 = sphi 0, %s135
  $region4: #{icnn_forward.1} parent=0 // loop_header_branch
    %14 = sbr.rel (%p12) target = $region8
  $region5: #{icnn_forward.1} parent=0 // loop_body
    %s16 = ssub.s32 %s11, 1
    %s17 = ssub.s32 %s11, 2
    %s18 = sadd.s32 %s11, 1
    %s19 = ssub.s32 %s11, %s18
    %p20 = scmp.eq.s32.totalorder %s19, 0
    %s22 = sadd.s32 %s21, 1
    %s23 = scalar_select %p20, %s21, %s22
    %p26 = pneg %p20
    %p27 = scmp.eq.s32.totalorder %s11, 1
    %p28 = por %p26, %p27
    %p29 = scmp.ne.s32.totalorder %s21, %s24
    %p30 = scmp.eq.s32.totalorder %s11, 0
    %p31 = por %p29, %p30
    %p32 = scmp.ne.s32.totalorder %s21, %s24
    %p33 = scmp.eq.s32.totalorder %s16, 1
    %p34 = por %p32, %p33
    %p35 = scmp.ne.s32.totalorder %s24, %s25
    %p36 = scmp.eq.s32.totalorder %s16, 0
    %p37 = por %p35, %p36
    %p38 = scmp.ne.s32.totalorder %s24, %s25
    %p39 = scmp.eq.s32.totalorder %s17, 1
    %p40 = por %p38, %p39
    %p42 = scmp.ne.s32.totalorder %s25, %s41
    %p43 = scmp.eq.s32.totalorder %s17, 0
    %p44 = por %p42, %p43
    %s46 = sadd.s32 %s45, 1
    %p49 = scmp.eq.s32.totalorder %s11, 1
    %p50 = scmp.ne.s32.totalorder %s45, %s47
    %p51 = scmp.eq.s32.totalorder %s11, 0
    %p52 = por %p50, %p51
    %p53 = scmp.ne.s32.totalorder %s45, %s47
    %p54 = scmp.eq.s32.totalorder %s16, 1
    %p55 = por %p53, %p54
    %p56 = scmp.ne.s32.totalorder %s47, %s48
    %p57 = scmp.eq.s32.totalorder %s16, 0
    %p58 = por %p56, %p57
    %p59 = scmp.ne.s32.totalorder %s47, %s48
    %p60 = scmp.eq.s32.totalorder %s17, 1
    %p61 = por %p59, %p60
    %p63 = scmp.ne.s32.totalorder %s48, %s62
    %p64 = scmp.eq.s32.totalorder %s17, 0
    %p65 = por %p63, %p64
    %s67 = sadd.s32 %s66, 1
    %p70 = scmp.eq.s32.totalorder %s11, 1
    %p71 = scmp.ne.s32.totalorder %s66, %s68
    %p72 = scmp.eq.s32.totalorder %s11, 0
    %p73 = por %p71, %p72
    %p74 = scmp.ne.s32.totalorder %s66, %s68
    %p75 = scmp.eq.s32.totalorder %s16, 1
    %p76 = por %p74, %p75
    %p77 = scmp.ne.s32.totalorder %s68, %s69
    %p78 = scmp.eq.s32.totalorder %s16, 0
    %p79 = por %p77, %p78
    %p80 = scmp.ne.s32.totalorder %s68, %s69
    %p81 = scmp.eq.s32.totalorder %s17, 1
    %p82 = por %p80, %p81
    %p84 = scmp.ne.s32.totalorder %s69, %s83
    %p85 = scmp.eq.s32.totalorder %s17, 0
    %p86 = por %p84, %p85
    %s88 = sadd.s32 %s87, 1
    %p91 = scmp.eq.s32.totalorder %s11, 1
    %p92 = scmp.ne.s32.totalorder %s87, %s89
    %p93 = scmp.eq.s32.totalorder %s11, 0
    %p94 = por %p92, %p93
    %p95 = scmp.ne.s32.totalorder %s87, %s89
    %p96 = scmp.eq.s32.totalorder %s16, 1
    %p97 = por %p95, %p96
    %p98 = scmp.ne.s32.totalorder %s89, %s90
    %p99 = scmp.eq.s32.totalorder %s16, 0
    %p100 = por %p98, %p99
    %p101 = scmp.ne.s32.totalorder %s89, %s90
    %p102 = scmp.eq.s32.totalorder %s17, 1
    %p103 = por %p101, %p102
    %p105 = scmp.ne.s32.totalorder %s90, %s104
    %p106 = scmp.eq.s32.totalorder %s17, 0
    %p107 = por %p105, %p106
    %s109 = sadd.s32 %s108, 1
    %p112 = scmp.eq.s32.totalorder %s11, 1
    %p113 = scmp.ne.s32.totalorder %s108, %s110
    %p114 = scmp.eq.s32.totalorder %s11, 0
    %p115 = por %p113, %p114
    %p116 = scmp.ne.s32.totalorder %s108, %s110
    %p117 = scmp.eq.s32.totalorder %s16, 1
    %p118 = por %p116, %p117
    %p119 = scmp.ne.s32.totalorder %s110, %s111
    %p120 = scmp.eq.s32.totalorder %s16, 0
    %p121 = por %p119, %p120
    %p122 = scmp.ne.s32.totalorder %s110, %s111
    %p123 = scmp.eq.s32.totalorder %s17, 1
    %p124 = por %p122, %p123
    %p126 = scmp.ne.s32.totalorder %s111, %s125
    %p127 = scmp.eq.s32.totalorder %s17, 0
    %p128 = por %p126, %p127
    %s129 = ssub.s32 %s11, %s18
    %p130 = scmp.eq.s32.totalorder %s129, 0
    %s132 = sadd.s32 %s131, 1
    %s133 = scalar_select %p130, %s131, %s132
    %p136 = pneg %p130
    %p137 = scmp.eq.s32.totalorder %s11, 1
    %p138 = por %p136, %p137
    %p139 = scmp.ne.s32.totalorder %s131, %s134
    %p140 = scmp.eq.s32.totalorder %s11, 0
    %p141 = por %p139, %p140
    %p142 = scmp.ne.s32.totalorder %s131, %s134
    %p143 = scmp.eq.s32.totalorder %s16, 1
    %p144 = por %p142, %p143
    %p145 = scmp.ne.s32.totalorder %s134, %s135
    %p146 = scmp.eq.s32.totalorder %s16, 0
    %p147 = por %p145, %p146
    %p148 = scmp.ne.s32.totalorder %s134, %s135
    %p149 = scmp.eq.s32.totalorder %s17, 1
    %p150 = por %p148, %p149
    %p152 = scmp.ne.s32.totalorder %s135, %s151
    %p153 = scmp.eq.s32.totalorder %s17, 0
    %p154 = por %p152, %p153
    %p155 = scmp.le.s32.totalorder 1, %s11
    %p156 = scmp.lt.s32.totalorder %s11, 3
    %p157 = pnand %p155, %p156
    %p158 = pneg %p157
    // Predicated region
    $region9: #{icnn_forward.1} parent=5 // pred_check
      _
    $region10: #{icnn_forward.1} parent=5 // pred_check_branch
      %160 = sbr.rel (%p157) target = $region12
    $region11: #{icnn_forward.1} parent=5 // pred_region
      %s161 = ssub.s32 %s11, 1
      // Predicated region
      $region13: #{icnn_forward.1} parent=11 // pred_check
        %p162 = pneg %p58
      $region14: #{icnn_forward.1} parent=11 // pred_check_branch
        %164 = sbr.rel (%p162) target = $region16
      $region15: #{icnn_forward.1} parent=11 // pred_region
        _
      $region16: #{icnn_forward.1} parent=11 // pred_fallthru
        _
      // Predicated region
      $region17: #{icnn_forward.1} parent=11 // pred_check
        %p165 = pneg %p79
      $region18: #{icnn_forward.1} parent=11 // pred_check_branch
        %167 = sbr.rel (%p165) target = $region20
      $region19: #{icnn_forward.1} parent=11 // pred_region
        _
      $region20: #{icnn_forward.1} parent=11 // pred_fallthru
        _
      // Predicated region
      $region21: #{icnn_forward.1} parent=11 // pred_check
        %p168 = pneg %p100
      $region22: #{icnn_forward.1} parent=11 // pred_check_branch
        %170 = sbr.rel (%p168) target = $region24
      $region23: #{icnn_forward.1} parent=11 // pred_region
        _
      $region24: #{icnn_forward.1} parent=11 // pred_fallthru
        _
      // Predicated region
      $region25: #{icnn_forward.1} parent=11 // pred_check
        %p171 = pneg %p121
      $region26: #{icnn_forward.1} parent=11 // pred_check_branch
        %173 = sbr.rel (%p171) target = $region28
      $region27: #{icnn_forward.1} parent=11 // pred_region
        _
      $region28: #{icnn_forward.1} parent=11 // pred_fallthru
        _
    $region12: #{icnn_forward.1} parent=5 // pred_fallthru
      _
    %p174 = scmp.lt.s32.totalorder %s11, 2
    // Predicated region
    $region29: #{icnn_forward.1} parent=5 // pred_check
      %p175 = pneg %p174
    $region30: #{icnn_forward.1} parent=5 // pred_check_branch
      %177 = sbr.rel (%p175) target = $region32
    $region31: #{icnn_forward.1} parent=5 // pred_region
      // Predicated region
      $region33: #{icnn_forward.1} parent=31 // pred_check
        %p178 = pneg %p31
      $region34: #{icnn_forward.1} parent=31 // pred_check_branch
        %180 = sbr.rel (%p178) target = $region36
      $region35: #{icnn_forward.1} parent=31 // pred_region
        %s181 = smul.u32 48, %s11
        %p182 = scmp.lt.s32.totalorder %s181, 95
        %s183 = scalar_select %p182, %s181, 95
        %s184 = smul.addr %s183, 4
        %s185 = scalar_lea.vmem %s0, %s184
        %s186 = smul.u32 48, %s11
      $region36: #{icnn_forward.1} parent=31 // pred_fallthru
        _
    $region32: #{icnn_forward.1} parent=5 // pred_fallthru
      _
    %p187 = scmp.le.s32.totalorder 1, %s11
    %p188 = scmp.lt.s32.totalorder %s11, 3
    %p189 = pnand %p187, %p188
    %p190 = pneg %p189
    // Predicated region
    $region37: #{icnn_forward.1} parent=5 // pred_check
      _
    $region38: #{icnn_forward.1} parent=5 // pred_check_branch
      %192 = sbr.rel (%p189) target = $region40
    $region39: #{icnn_forward.1} parent=5 // pred_region
      %s193 = ssub.s32 %s11, 1
      %s194 = smul.u32 48, %s16
      %p195 = scmp.lt.s32.totalorder %s194, 95
      %s196 = scalar_select %p195, %s194, 95
      %s197 = smul.addr %s196, 4
      %s198 = scalar_lea.vmem %s0, %s197
      %p199 = pneg %p37
      %p200 = pneg %p34
      %p201 = pneg %p58
      %p202 = pneg %p55
      %p203 = pneg %p79
      %p204 = pneg %p76
      %p205 = pneg %p100
      %p206 = pneg %p97
      %p207 = pneg %p121
      %p208 = pneg %p118
      %p209 = pneg %p147
      %p210 = pneg %p144
      %s211 = smul.u32 3, %s16
      %p212 = scmp.lt.s32.totalorder %s211, 5
      %s213 = scalar_select %p212, %s211, 5
      %s214 = scalar_lea.vmem %s5, %s213
      %s215 = smul.u32 48, %s16
      %p216 = scmp.lt.s32.totalorder %s215, 95
      %s217 = scalar_select %p216, %s215, 95
      %s218 = smul.addr %s217, 4
      %s219 = scalar_lea.vmem %s0, %s218
      %s220 = smul.u32 48, %s16
      %s221 = smul.u32 3, %s16
      %p222 = scmp.lt.s32.totalorder %s221, 5
      %s223 = scalar_select %p222, %s221, 5
      %s224 = scalar_lea.vmem %s5, %s223
      %s225 = smul.u32 3, %s16
      %v227 = vld [vmem:[%s1] sm:$0xf]
      %v228 = vld [vmem:[%s1 + $0x4] sm:$0xf]
      %v229 = vld [vmem:[%s1 + $0x8] sm:$0xf]
      %v230 = vld [vmem:[%s1 + $0xc] sm:$0xf]
      %v231 = vld [vmem:[%s1 + $0x10] sm:$0xf]
      %v232 = vld [vmem:[%s1 + $0x14] sm:$0xf]
      %v233 = vld [vmem:[%s1 + $0x18] sm:$0xf]
      %v234 = vld [vmem:[%s1 + $0x1c] sm:$0xf]
      %v235 = vld [vmem:[%s1 + $0x20] sm:$0x1]
      %v236 = vld [vmem:[%s219] sm:$0xf]
      %v237 = vld [vmem:[%s219 + $0x4] sm:$0xf]
      %v238 = vld [vmem:[%s219 + $0x8] sm:$0xf]
      %v239 = vld [vmem:[%s219 + $0xc] sm:$0xf]
      %v240 = vld [vmem:[%s219 + $0x10] sm:$0xf]
      %v241 = vld [vmem:[%s219 + $0x14] sm:$0xf]
      %v242 = vld [vmem:[%s219 + $0x18] sm:$0xf]
      %v243 = vld [vmem:[%s219 + $0x1c] sm:$0xf]
      %v244 = vld [vmem:[%s219 + $0x20] sm:$0xf]
      %v245 = vld [vmem:[%s219 + $0x24] sm:$0xf]
      %v246 = vld [vmem:[%s219 + $0x28] sm:$0xf]
      %v247 = vld [vmem:[%s219 + $0x2c] sm:$0xf]
      %v248 = vld [vmem:[%s219 + $0x30] sm:$0xf]
      %v249 = vld [vmem:[%s219 + $0x34] sm:$0xf]
      %v250 = vld [vmem:[%s219 + $0x38] sm:$0xf]
      %v251 = vld [vmem:[%s219 + $0x3c] sm:$0xf]
      %v252 = vld [vmem:[%s219 + $0x40] sm:$0xf]
      %v253 = vld [vmem:[%s219 + $0x44] sm:$0xf]
      %v254 = vld [vmem:[%s219 + $0x48] sm:$0xf]
      %v255 = vld [vmem:[%s219 + $0x4c] sm:$0xf]
      %v256 = vld [vmem:[%s219 + $0x50] sm:$0xf]
      %v257 = vld [vmem:[%s219 + $0x54] sm:$0xf]
      %v258 = vld [vmem:[%s219 + $0x58] sm:$0xf]
      %v259 = vld [vmem:[%s219 + $0x5c] sm:$0xf]
      %v260 = vld [vmem:[%s219 + $0x60] sm:$0xf]
      %v261 = vld [vmem:[%s219 + $0x64] sm:$0xf]
      %v262 = vld [vmem:[%s219 + $0x68] sm:$0xf]
      %v263 = vld [vmem:[%s219 + $0x6c] sm:$0xf]
      %v264 = vld [vmem:[%s219 + $0x70] sm:$0xf]
      %v265 = vld [vmem:[%s219 + $0x74] sm:$0xf]
      %v266 = vld [vmem:[%s219 + $0x78] sm:$0xf]
      %v267 = vld [vmem:[%s219 + $0x7c] sm:$0xf]
      %v268 = vld [vmem:[%s219 + $0x80] sm:$0xf]
      %v269 = vld [vmem:[%s219 + $0x84] sm:$0xf]
      %v270 = vld [vmem:[%s219 + $0x88] sm:$0xf]
      %v271 = vld [vmem:[%s219 + $0x8c] sm:$0xf]
      %v272 = vld [vmem:[%s219 + $0x90] sm:$0xf]
      %v273 = vld [vmem:[%s219 + $0x94] sm:$0xf]
      %v274 = vld [vmem:[%s219 + $0x98] sm:$0xf]
      %v275 = vld [vmem:[%s219 + $0x9c] sm:$0xf]
      %v276 = vld [vmem:[%s219 + $0xa0] sm:$0xf]
      %v277 = vld [vmem:[%s219 + $0xa4] sm:$0xf]
      %v278 = vld [vmem:[%s219 + $0xa8] sm:$0xf]
      %v279 = vld [vmem:[%s219 + $0xac] sm:$0xf]
      %v280 = vld [vmem:[%s219 + $0xb0] sm:$0xf]
      %v281 = vld [vmem:[%s219 + $0xb4] sm:$0xf]
      %v282 = vld [vmem:[%s219 + $0xb8] sm:$0xf]
      %v283 = vld [vmem:[%s219 + $0xbc] sm:$0xf]
      %v284 = vld [vmem:[%s2] sm:$0xff]
      %v285 = vld [vmem:[%s2 + $0x8] sm:$0xff]
      %v286 = vld [vmem:[%s2 + $0x10] sm:$0xff]
      %v287 = vld [vmem:[%s2 + $0x18] sm:$0xff]
      %v288 = vld [vmem:[%s2 + $0x20] sm:$0xff]
      %v289 = vld [vmem:[%s2 + $0x28] sm:$0xff]
      %v290 = vld [vmem:[%s2 + $0x30] sm:$0xff]
      %v291 = vld [vmem:[%s2 + $0x38] sm:$0xff]
      %v292 = vld [vmem:[%s2 + $0x40] sm:$0x1]
      %294 = vset.pattern.permute.xlu0 0
      %295 = vperm.xlu0 %294, %v284
      %v296 = vpop.permute.xlu0 %295
      %299 = vset.pattern.permute.xlu0 0
      %300 = vperm.xlu0 %299, %v285
      %v301 = vpop.permute.xlu0 %300
      %304 = vset.pattern.permute.xlu0 0
      %305 = vperm.xlu0 %304, %v286
      %v306 = vpop.permute.xlu0 %305
      %309 = vset.pattern.permute.xlu0 0
      %310 = vperm.xlu0 %309, %v287
      %v311 = vpop.permute.xlu0 %310
      %314 = vset.pattern.permute.xlu0 0
      %315 = vperm.xlu0 %314, %v288
      %v316 = vpop.permute.xlu0 %315
      %319 = vset.pattern.permute.xlu0 0
      %320 = vperm.xlu0 %319, %v289
      %v321 = vpop.permute.xlu0 %320
      %324 = vset.pattern.permute.xlu0 0
      %325 = vperm.xlu0 %324, %v290
      %v326 = vpop.permute.xlu0 %325
      %329 = vset.pattern.permute.xlu0 0
      %330 = vperm.xlu0 %329, %v291
      %v331 = vpop.permute.xlu0 %330
      %334 = vset.pattern.permute.xlu0 0
      %335 = vperm.xlu0 %334, %v292
      %v336 = vpop.permute.xlu0 %335
      %v347 = vunpack.c.l.b16 %v227
      %v348 = vunpack.c.l.b16 %v228
      %v349 = vunpack.c.l.b16 %v229
      %v350 = vunpack.c.l.b16 %v230
      %v351 = vunpack.c.l.b16 %v231
      %v352 = vunpack.c.l.b16 %v232
      %v353 = vunpack.c.l.b16 %v233
      %v354 = vunpack.c.l.b16 %v234
      %v355 = vunpack.c.l.b16 %v235
      %v356 = vpack.c.b16 %v348, %v347
      %v357 = vpack.c.b16 %v350, %v349
      %v358 = vpack.c.b16 %v352, %v351
      %v359 = vpack.c.b16 %v354, %v353
      %v360 = vpack.c.b16 %v355, %v355
      %v409 = vunpack.c.l.b16 %v236
      %v410 = vunpack.c.l.b16 %v237
      %v411 = vunpack.c.l.b16 %v238
      %v412 = vunpack.c.l.b16 %v239
      %v413 = vunpack.c.l.b16 %v240
      %v414 = vunpack.c.l.b16 %v241
      %v415 = vunpack.c.l.b16 %v242
      %v416 = vunpack.c.l.b16 %v243
      %v417 = vunpack.c.l.b16 %v244
      %v418 = vunpack.c.l.b16 %v245
      %v419 = vunpack.c.l.b16 %v246
      %v420 = vunpack.c.l.b16 %v247
      %v421 = vunpack.c.l.b16 %v248
      %v422 = vunpack.c.l.b16 %v249
      %v423 = vunpack.c.l.b16 %v250
      %v424 = vunpack.c.l.b16 %v251
      %v425 = vunpack.c.l.b16 %v252
      %v426 = vunpack.c.l.b16 %v253
      %v427 = vunpack.c.l.b16 %v254
      %v428 = vunpack.c.l.b16 %v255
      %v429 = vunpack.c.l.b16 %v256
      %v430 = vunpack.c.l.b16 %v257
      %v431 = vunpack.c.l.b16 %v258
      %v432 = vunpack.c.l.b16 %v259
      %v433 = vunpack.c.l.b16 %v260
      %v434 = vunpack.c.l.b16 %v261
      %v435 = vunpack.c.l.b16 %v262
      %v436 = vunpack.c.l.b16 %v263
      %v437 = vunpack.c.l.b16 %v264
      %v438 = vunpack.c.l.b16 %v265
      %v439 = vunpack.c.l.b16 %v266
      %v440 = vunpack.c.l.b16 %v267
      %v441 = vunpack.c.l.b16 %v268
      %v442 = vunpack.c.l.b16 %v269
      %v443 = vunpack.c.l.b16 %v270
      %v444 = vunpack.c.l.b16 %v271
      %v445 = vunpack.c.l.b16 %v272
      %v446 = vunpack.c.l.b16 %v273
      %v447 = vunpack.c.l.b16 %v274
      %v448 = vunpack.c.l.b16 %v275
      %v449 = vunpack.c.l.b16 %v276
      %v450 = vunpack.c.l.b16 %v277
      %v451 = vunpack.c.l.b16 %v278
      %v452 = vunpack.c.l.b16 %v279
      %v453 = vunpack.c.l.b16 %v280
      %v454 = vunpack.c.l.b16 %v281
      %v455 = vunpack.c.l.b16 %v282
      %v456 = vunpack.c.l.b16 %v283
      %v457 = vpack.c.b16 %v410, %v409
      %v458 = vpack.c.b16 %v412, %v411
      %v459 = vpack.c.b16 %v414, %v413
      %v460 = vpack.c.b16 %v416, %v415
      %v461 = vpack.c.b16 %v418, %v417
      %v462 = vpack.c.b16 %v420, %v419
      %v463 = vpack.c.b16 %v422, %v421
      %v464 = vpack.c.b16 %v424, %v423
      %v465 = vpack.c.b16 %v426, %v425
      %v466 = vpack.c.b16 %v428, %v427
      %v467 = vpack.c.b16 %v430, %v429
      %v468 = vpack.c.b16 %v432, %v431
      %v469 = vpack.c.b16 %v434, %v433
      %v470 = vpack.c.b16 %v436, %v435
      %v471 = vpack.c.b16 %v438, %v437
      %v472 = vpack.c.b16 %v440, %v439
      %v473 = vpack.c.b16 %v442, %v441
      %v474 = vpack.c.b16 %v444, %v443
      %v475 = vpack.c.b16 %v446, %v445
      %v476 = vpack.c.b16 %v448, %v447
      %v477 = vpack.c.b16 %v450, %v449
      %v478 = vpack.c.b16 %v452, %v451
      %v479 = vpack.c.b16 %v454, %v453
      %v480 = vpack.c.b16 %v456, %v455
      %vm481 = vcmask 31744
      %v483 = vsel %vm481, %v356, 0
      %v486 = vsel %vm481, %v357, 0
      %v489 = vsel %vm481, %v358, 0
      %v492 = vsel %vm481, %v359, 0
      %v495 = vsel %vm481, %v360, 0
      %v498 = vsel %vm481, %v457, 0
      %v501 = vsel %vm481, %v458, 0
      %v504 = vsel %vm481, %v459, 0
      %v507 = vsel %vm481, %v460, 0
      %v510 = vsel %vm481, %v461, 0
      %v513 = vsel %vm481, %v462, 0
      %v516 = vsel %vm481, %v463, 0
      %v519 = vsel %vm481, %v464, 0
      %v522 = vsel %vm481, %v465, 0
      %v525 = vsel %vm481, %v466, 0
      %v528 = vsel %vm481, %v467, 0
      %v531 = vsel %vm481, %v468, 0
      %v534 = vsel %vm481, %v469, 0
      %v537 = vsel %vm481, %v470, 0
      %v540 = vsel %vm481, %v471, 0
      %v543 = vsel %vm481, %v472, 0
      %v546 = vsel %vm481, %v473, 0
      %v549 = vsel %vm481, %v474, 0
      %v552 = vsel %vm481, %v475, 0
      %v555 = vsel %vm481, %v476, 0
      %v558 = vsel %vm481, %v477, 0
      %v561 = vsel %vm481, %v478, 0
      %v564 = vsel %vm481, %v479, 0
      %v567 = vsel %vm481, %v480, 0
      %569 = vmatprep.subr.bf16.mxu0 0
      %570 = vmatpush1.bf16.xpose.msra.mxu0 %v519
      %571 = vmatprep.subr.bf16.mxu0 0
      %572 = vmatpush1.bf16.xpose.msra.mxu0 %v516
      %573 = vmatprep.subr.bf16.mxu0 0
      %574 = vmatpush1.bf16.xpose.msra.mxu0 %v513
      %575 = vmatprep.subr.bf16.mxu0 0
      %576 = vmatpush1.bf16.xpose.msra.mxu0 %v510
      %577 = vmatprep.subr.bf16.mxu0 0
      %578 = vmatpush1.bf16.xpose.msra.mxu0 %v507
      %579 = vmatprep.subr.bf16.mxu0 0
      %580 = vmatpush1.bf16.xpose.msra.mxu0 %v504
      %581 = vmatprep.subr.bf16.mxu0 0
      %582 = vmatpush1.bf16.xpose.msra.mxu0 %v501
      %583 = vmatprep.subr.bf16.mxu0 0
      %584 = vmatpush1.bf16.xpose.msra.mxu0 %v498
      %585 = vmatprep.subr.bf16.mxu0 0
      %586 = vmatpush2.bf16.xpose.msra.mxu0 %v543
      %587 = vmatprep.subr.bf16.mxu0 0
      %588 = vmatpush2.bf16.xpose.msra.mxu0 %v540
      %589 = vmatprep.subr.bf16.mxu0 0
      %590 = vmatpush2.bf16.xpose.msra.mxu0 %v537
      %591 = vmatprep.subr.bf16.mxu0 0
      %592 = vmatpush2.bf16.xpose.msra.mxu0 %v534
      %593 = vmatprep.subr.bf16.mxu0 0
      %594 = vmatpush2.bf16.xpose.msra.mxu0 %v531
      %595 = vmatprep.subr.bf16.mxu0 0
      %596 = vmatpush2.bf16.xpose.msra.mxu0 %v528
      %597 = vmatprep.subr.bf16.mxu0 0
      %598 = vmatpush2.bf16.xpose.msra.mxu0 %v525
      %599 = vmatprep.subr.bf16.mxu0 0
      %600 = vmatpush2.bf16.xpose.msra.mxu0 %v522
      %601 = vmatprep.mubr.bf16.mxu0 0
      %602 = vmatmul.mubr.bf16.gmra.mxu0 %v483
      %v603 = vpop.f32.mrf.mxu0
      %v604 = vadd.f32 %v296, %v603
      %v605 = vpop.f32.mrf.mxu0
      %v606 = vadd.f32 %v296, %v605
      %v607 = vpop.f32.mrf.mxu0
      %v608 = vadd.f32 %v301, %v607
      %v609 = vpop.f32.mrf.mxu0
      %v610 = vadd.f32 %v301, %v609
      %611 = vmatprep.mubr.bf16.mxu0 0
      %612 = vmatmul.mubr.bf16.gmra.mxu0 %v486
      %v613 = vpop.f32.mrf.mxu0
      %v614 = vadd.f32 %v306, %v613
      %v615 = vpop.f32.mrf.mxu0
      %v616 = vadd.f32 %v306, %v615
      %v617 = vpop.f32.mrf.mxu0
      %v618 = vadd.f32 %v311, %v617
      %v619 = vpop.f32.mrf.mxu0
      %v620 = vadd.f32 %v311, %v619
      %621 = vmatprep.mubr.bf16.mxu0 0
      %622 = vmatmul.mubr.bf16.gmra.mxu0 %v489
      %v623 = vpop.f32.mrf.mxu0
      %v624 = vadd.f32 %v316, %v623
      %v625 = vpop.f32.mrf.mxu0
      %v626 = vadd.f32 %v316, %v625
      %v627 = vpop.f32.mrf.mxu0
      %v628 = vadd.f32 %v321, %v627
      %v629 = vpop.f32.mrf.mxu0
      %v630 = vadd.f32 %v321, %v629
      %631 = vmatprep.mubr.bf16.mxu0 0
      %632 = vmatmul.mubr.bf16.gmra.mxu0 %v492
      %v633 = vpop.f32.mrf.mxu0
      %v634 = vadd.f32 %v326, %v633
      %v635 = vpop.f32.mrf.mxu0
      %v636 = vadd.f32 %v326, %v635
      %v637 = vpop.f32.mrf.mxu0
      %v638 = vadd.f32 %v331, %v637
      %v639 = vpop.f32.mrf.mxu0
      %v640 = vadd.f32 %v331, %v639
      %641 = vmatprep.mubr.bf16.mxu0 0
      %642 = vmatmul.mubr.bf16.gmra.mxu0 %v495
      %v643 = vpop.f32.mrf.mxu0
      %v644 = vadd.f32 %v336, %v643
      %v645 = vpop.f32.mrf.mxu0
      %v646 = vadd.f32 %v336, %v645
      %v647 = vpop.f32.mrf.mxu0
      %v648 = vpop.f32.mrf.mxu0
      %649 = vdwg.mxu0
      %650 = vmatprep.subr.bf16.mxu0 0
      %651 = vmatpush1.bf16.xpose.msra.mxu0 %v567
      %652 = vmatprep.subr.bf16.mxu0 0
      %653 = vmatpush1.bf16.xpose.msra.mxu0 %v564
      %654 = vmatprep.subr.bf16.mxu0 0
      %655 = vmatpush1.bf16.xpose.msra.mxu0 %v561
      %656 = vmatprep.subr.bf16.mxu0 0
      %657 = vmatpush1.bf16.xpose.msra.mxu0 %v558
      %658 = vmatprep.subr.bf16.mxu0 0
      %659 = vmatpush1.bf16.xpose.msra.mxu0 %v555
      %660 = vmatprep.subr.bf16.mxu0 0
      %661 = vmatpush1.bf16.xpose.msra.mxu0 %v552
      %662 = vmatprep.subr.bf16.mxu0 0
      %663 = vmatpush1.bf16.xpose.msra.mxu0 %v549
      %664 = vmatprep.subr.bf16.mxu0 0
      %665 = vmatpush1.bf16.xpose.msra.mxu0 %v546
      %666 = vmatprep.subr.bf16.mxu0 0
      %667 = vmatpush2.bf16.xpose.msra.mxu0 0
      %668 = vmatprep.subr.bf16.mxu0 0
      %669 = vmatpush2.bf16.xpose.msra.mxu0 0
      %670 = vmatprep.subr.bf16.mxu0 0
      %671 = vmatpush2.bf16.xpose.msra.mxu0 0
      %672 = vmatprep.subr.bf16.mxu0 0
      %673 = vmatpush2.bf16.xpose.msra.mxu0 0
      %674 = vmatprep.subr.bf16.mxu0 0
      %675 = vmatpush2.bf16.xpose.msra.mxu0 0
      %676 = vmatprep.subr.bf16.mxu0 0
      %677 = vmatpush2.bf16.xpose.msra.mxu0 0
      %678 = vmatprep.subr.bf16.mxu0 0
      %679 = vmatpush2.bf16.xpose.msra.mxu0 0
      %680 = vmatprep.subr.bf16.mxu0 0
      %681 = vmatpush2.bf16.xpose.msra.mxu0 0
      %682 = vmatprep.mubr.bf16.mxu0 0
      %683 = vmatmul.mubr.bf16.gmra.mxu0 %v483
      %v684 = vpop.f32.mrf.mxu0
      %v685 = vadd.f32 %v296, %v684
      %v686 = vpop.f32.mrf.mxu0
      %v687 = vpop.f32.mrf.mxu0
      %v688 = vadd.f32 %v301, %v687
      %v689 = vpop.f32.mrf.mxu0
      %690 = vmatprep.mubr.bf16.mxu0 0
      %691 = vmatmul.mubr.bf16.gmra.mxu0 %v486
      %v692 = vpop.f32.mrf.mxu0
      %v693 = vadd.f32 %v306, %v692
      %v694 = vpop.f32.mrf.mxu0
      %v695 = vpop.f32.mrf.mxu0
      %v696 = vadd.f32 %v311, %v695
      %v697 = vpop.f32.mrf.mxu0
      %698 = vmatprep.mubr.bf16.mxu0 0
      %699 = vmatmul.mubr.bf16.gmra.mxu0 %v489
      %v700 = vpop.f32.mrf.mxu0
      %v701 = vadd.f32 %v316, %v700
      %v702 = vpop.f32.mrf.mxu0
      %v703 = vpop.f32.mrf.mxu0
      %v704 = vadd.f32 %v321, %v703
      %v705 = vpop.f32.mrf.mxu0
      %706 = vmatprep.mubr.bf16.mxu0 0
      %707 = vmatmul.mubr.bf16.gmra.mxu0 %v492
      %v708 = vpop.f32.mrf.mxu0
      %v709 = vadd.f32 %v326, %v708
      %v710 = vpop.f32.mrf.mxu0
      %v711 = vpop.f32.mrf.mxu0
      %v712 = vadd.f32 %v331, %v711
      %v713 = vpop.f32.mrf.mxu0
      %714 = vmatprep.mubr.bf16.mxu0 0
      %715 = vmatmul.mubr.bf16.gmra.mxu0 %v495
      %v716 = vpop.f32.mrf.mxu0
      %v717 = vadd.f32 %v336, %v716
      %v718 = vpop.f32.mrf.mxu0
      %v719 = vpop.f32.mrf.mxu0
      %v720 = vpop.f32.mrf.mxu0
      %721 = vdwg.mxu0
      %722 = vst [vmem:[#allocation2] sm:$0xff] %v604
      %723 = vst [vmem:[#allocation2 + $0x8] sm:$0xff] %v606
      %724 = vst [vmem:[#allocation2 + $0x10] sm:$0xff] %v685
      %725 = vst [vmem:[#allocation2 + $0x18] sm:$0xff] %v608
      %726 = vst [vmem:[#allocation2 + $0x20] sm:$0xff] %v610
      %727 = vst [vmem:[#allocation2 + $0x28] sm:$0xff] %v688
      %728 = vst [vmem:[#allocation2 + $0x30] sm:$0xff] %v614
      %729 = vst [vmem:[#allocation2 + $0x38] sm:$0xff] %v616
      %730 = vst [vmem:[#allocation2 + $0x40] sm:$0xff] %v693
      %731 = vst [vmem:[#allocation2 + $0x48] sm:$0xff] %v618
      %732 = vst [vmem:[#allocation2 + $0x50] sm:$0xff] %v620
      %733 = vst [vmem:[#allocation2 + $0x58] sm:$0xff] %v696
      %734 = vst [vmem:[#allocation2 + $0x60] sm:$0xff] %v624
      %735 = vst [vmem:[#allocation2 + $0x68] sm:$0xff] %v626
      %736 = vst [vmem:[#allocation2 + $0x70] sm:$0xff] %v701
      %737 = vst [vmem:[#allocation2 + $0x78] sm:$0xff] %v628
      %738 = vst [vmem:[#allocation2 + $0x80] sm:$0xff] %v630
      %739 = vst [vmem:[#allocation2 + $0x88] sm:$0xff] %v704
      %740 = vst [vmem:[#allocation2 + $0x90] sm:$0xff] %v634
      %741 = vst [vmem:[#allocation2 + $0x98] sm:$0xff] %v636
      %742 = vst [vmem:[#allocation2 + $0xa0] sm:$0xff] %v709
      %743 = vst [vmem:[#allocation2 + $0xa8] sm:$0xff] %v638
      %744 = vst [vmem:[#allocation2 + $0xb0] sm:$0xff] %v640
      %745 = vst [vmem:[#allocation2 + $0xb8] sm:$0xff] %v712
      %746 = vst [vmem:[#allocation2 + $0xc0] sm:$0x1] %v644
      %747 = vst [vmem:[#allocation2 + $0xc8] sm:$0x1] %v646
      %748 = vst [vmem:[#allocation2 + $0xd0] sm:$0x1] %v717
      %v749 = vld [vmem:[#allocation2] sm:$0xff]
      %v750 = vld [vmem:[#allocation2 + $0x8] sm:$0xff]
      %v751 = vld [vmem:[#allocation2 + $0x10] sm:$0xff]
      %v752 = vld [vmem:[#allocation2 + $0x18] sm:$0xff]
      %v753 = vld [vmem:[#allocation2 + $0x20] sm:$0xff]
      %v754 = vld [vmem:[#allocation2 + $0x28] sm:$0xff]
      %v755 = vld [vmem:[#allocation2 + $0x30] sm:$0xff]
      %v756 = vld [vmem:[#allocation2 + $0x38] sm:$0xff]
      %v757 = vld [vmem:[#allocation2 + $0x40] sm:$0xff]
      %v758 = vld [vmem:[#allocation2 + $0x48] sm:$0xff]
      %v759 = vld [vmem:[#allocation2 + $0x50] sm:$0xff]
      %v760 = vld [vmem:[#allocation2 + $0x58] sm:$0xff]
      %vm761 = vcmp.le.f32.partialorder %v749, 0.01
      %vm762 = vcmp.le.f32.partialorder %v750, 0.01
      %vm763 = vcmp.le.f32.partialorder %v751, 0.01
      %vm764 = vcmp.le.f32.partialorder %v752, 0.01
      %vm765 = vcmp.le.f32.partialorder %v753, 0.01
      %vm766 = vcmp.le.f32.partialorder %v754, 0.01
      %vm767 = vcmp.le.f32.partialorder %v755, 0.01
      %vm768 = vcmp.le.f32.partialorder %v756, 0.01
      %vm769 = vcmp.le.f32.partialorder %v757, 0.01
      %vm770 = vcmp.le.f32.partialorder %v758, 0.01
      %vm771 = vcmp.le.f32.partialorder %v759, 0.01
      %vm772 = vcmp.le.f32.partialorder %v760, 0.01
      %vm773 = vcmp.le.f32.partialorder %v749, 0.0
      %vm774 = vcmp.le.f32.partialorder %v750, 0.0
      %vm775 = vcmp.le.f32.partialorder %v751, 0.0
      %vm776 = vcmp.le.f32.partialorder %v752, 0.0
      %vm777 = vcmp.le.f32.partialorder %v753, 0.0
      %vm778 = vcmp.le.f32.partialorder %v754, 0.0
      %vm779 = vcmp.le.f32.partialorder %v755, 0.0
      %vm780 = vcmp.le.f32.partialorder %v756, 0.0
      %vm781 = vcmp.le.f32.partialorder %v757, 0.0
      %vm782 = vcmp.le.f32.partialorder %v758, 0.0
      %vm783 = vcmp.le.f32.partialorder %v759, 0.0
      %vm784 = vcmp.le.f32.partialorder %v760, 0.0
      %v785 = vmul.f32 %v749, %v749
      %v786 = vmul.f32 %v750, %v750
      %v787 = vmul.f32 %v751, %v751
      %v788 = vmul.f32 %v752, %v752
      %v789 = vmul.f32 %v753, %v753
      %v790 = vmul.f32 %v754, %v754
      %v791 = vmul.f32 %v755, %v755
      %v792 = vmul.f32 %v756, %v756
      %v793 = vmul.f32 %v757, %v757
      %v794 = vmul.f32 %v758, %v758
      %v795 = vmul.f32 %v759, %v759
      %v796 = vmul.f32 %v760, %v760
      %v797 = vrcp.pop 0.02
      %v798 = vmul.f32 %v785, %v797
      %v799 = vmul.f32 %v786, %v797
      %v800 = vmul.f32 %v787, %v797
      %v801 = vmul.f32 %v788, %v797
      %v802 = vmul.f32 %v789, %v797
      %v803 = vmul.f32 %v790, %v797
      %v804 = vmul.f32 %v791, %v797
      %v805 = vmul.f32 %v792, %v797
      %v806 = vmul.f32 %v793, %v797
      %v807 = vmul.f32 %v794, %v797
      %v808 = vmul.f32 %v795, %v797
      %v809 = vmul.f32 %v796, %v797
      %v810 = vsel %vm773, 0.0, %v798
      %v811 = vsel %vm774, 0.0, %v799
      %v812 = vsel %vm775, 0.0, %v800
      %v813 = vsel %vm776, 0.0, %v801
      %v814 = vsel %vm777, 0.0, %v802
      %v815 = vsel %vm778, 0.0, %v803
      %v816 = vsel %vm779, 0.0, %v804
      %v817 = vsel %vm780, 0.0, %v805
      %v818 = vsel %vm781, 0.0, %v806
      %v819 = vsel %vm782, 0.0, %v807
      %v820 = vsel %vm783, 0.0, %v808
      %v821 = vsel %vm784, 0.0, %v809
      %v822 = vsub.f32 %v749, 0.005
      %v823 = vsub.f32 %v750, 0.005
      %v824 = vsub.f32 %v751, 0.005
      %v825 = vsub.f32 %v752, 0.005
      %v826 = vsub.f32 %v753, 0.005
      %v827 = vsub.f32 %v754, 0.005
      %v828 = vsub.f32 %v755, 0.005
      %v829 = vsub.f32 %v756, 0.005
      %v830 = vsub.f32 %v757, 0.005
      %v831 = vsub.f32 %v758, 0.005
      %v832 = vsub.f32 %v759, 0.005
      %v833 = vsub.f32 %v760, 0.005
      %v834 = vsel %vm761, %v810, %v822
      %v835 = vsel %vm762, %v811, %v823
      %v836 = vsel %vm763, %v812, %v824
      %v837 = vsel %vm764, %v813, %v825
      %v838 = vsel %vm765, %v814, %v826
      %v839 = vsel %vm766, %v815, %v827
      %v840 = vsel %vm767, %v816, %v828
      %v841 = vsel %vm768, %v817, %v829
      %v842 = vsel %vm769, %v818, %v830
      %v843 = vsel %vm770, %v819, %v831
      %v844 = vsel %vm771, %v820, %v832
      %v845 = vsel %vm772, %v821, %v833
      %v846 = vld [vmem:[%s3] sm:$0xf]
      %v847 = vld [vmem:[%s3 + $0x4] sm:$0xf]
      %v848 = vld [vmem:[%s3 + $0x8] sm:$0xf]
      %v849 = vld [vmem:[%s3 + $0xc] sm:$0xf]
      %v850 = vpack.c.bf16 %v837, %v834
      %v851 = vpack.c.bf16 %v838, %v835
      %v852 = vpack.c.bf16 %v839, %v836
      %v853 = vpack.c.bf16 %v843, %v840
      %v854 = vpack.c.bf16 %v844, %v841
      %v855 = vpack.c.bf16 %v845, %v842
      %v860 = vunpack.c.l.b16 %v846
      %v861 = vunpack.c.l.b16 %v847
      %v862 = vunpack.c.l.b16 %v848
      %v863 = vunpack.c.l.b16 %v849
      %v864 = vpack.c.b16 %v861, %v860
      %v865 = vpack.c.b16 %v863, %v862
      %vm866 = vcmask 261120
      %v868 = vsel %vm866, %v864, 0
      %v871 = vsel %vm866, %v865, 0
      %873 = vmatprep.subr.bf16.mxu0 0
      %874 = vmatpush1.bf16.msra.mxu0 0
      %875 = vmatprep.subr.bf16.mxu0 0
      %876 = vmatpush1.bf16.msra.mxu0 0
      %877 = vmatprep.subr.bf16.mxu0 0
      %878 = vmatpush1.bf16.msra.mxu0 0
      %879 = vmatprep.subr.bf16.mxu0 0
      %880 = vmatpush1.bf16.msra.mxu0 0
      %881 = vmatprep.subr.bf16.mxu0 0
      %882 = vmatpush1.bf16.msra.mxu0 0
      %883 = vmatprep.subr.bf16.mxu0 0
      %884 = vmatpush1.bf16.msra.mxu0 0
      %885 = vmatprep.subr.bf16.mxu0 %v854
      %886 = vmatpush1.bf16.msra.mxu0 %v853
      %887 = vmatprep.subr.bf16.mxu0 %v851
      %888 = vmatpush1.bf16.msra.mxu0 %v850
      %889 = vmatprep.subr.bf16.mxu0 0
      %890 = vmatpush2.bf16.msra.mxu0 0
      %891 = vmatprep.subr.bf16.mxu0 0
      %892 = vmatpush2.bf16.msra.mxu0 0
      %893 = vmatprep.subr.bf16.mxu0 0
      %894 = vmatpush2.bf16.msra.mxu0 0
      %895 = vmatprep.subr.bf16.mxu0 0
      %896 = vmatpush2.bf16.msra.mxu0 0
      %897 = vmatprep.subr.bf16.mxu0 0
      %898 = vmatpush2.bf16.msra.mxu0 0
      %899 = vmatprep.subr.bf16.mxu0 0
      %900 = vmatpush2.bf16.msra.mxu0 0
      %901 = vmatprep.subr.bf16.mxu0 0
      %902 = vmatpush2.bf16.msra.mxu0 0
      %903 = vmatprep.subr.bf16.mxu0 0
      %904 = vmatpush2.bf16.msra.mxu0 0
      %905 = vmatprep.mubr.bf16.mxu0 0
      %906 = vmatmul.mubr.bf16.gmra.mxu0 %v868
      %v907 = vpop.f32.mrf.mxu0
      %v908 = vadd.f32 0.0, %v907
      %v909 = vpop.f32.mrf.mxu0
      %v910 = vadd.f32 0.0, %v909
      %v911 = vpop.f32.mrf.mxu0
      %v912 = vadd.f32 0.0, %v911
      %v913 = vpop.f32.mrf.mxu0
      %v914 = vadd.f32 0.0, %v913
      %915 = vmatprep.mubr.bf16.mxu0 0
      %916 = vmatmul.mubr.bf16.gmra.mxu0 %v871
      %v917 = vpop.f32.mrf.mxu0
      %v918 = vadd.f32 0.0, %v917
      %v919 = vpop.f32.mrf.mxu0
      %v920 = vadd.f32 0.0, %v919
      %v921 = vpop.f32.mrf.mxu0
      %v922 = vadd.f32 0.0, %v921
      %v923 = vpop.f32.mrf.mxu0
      %v924 = vadd.f32 0.0, %v923
      %925 = vdwg.mxu0
      %926 = vmatprep.subr.bf16.mxu0 0
      %927 = vmatpush1.bf16.msra.mxu0 0
      %928 = vmatprep.subr.bf16.mxu0 0
      %929 = vmatpush1.bf16.msra.mxu0 0
      %930 = vmatprep.subr.bf16.mxu0 0
      %931 = vmatpush1.bf16.msra.mxu0 0
      %932 = vmatprep.subr.bf16.mxu0 0
      %933 = vmatpush1.bf16.msra.mxu0 0
      %934 = vmatprep.subr.bf16.mxu0 0
      %935 = vmatpush1.bf16.msra.mxu0 0
      %936 = vmatprep.subr.bf16.mxu0 0
      %937 = vmatpush1.bf16.msra.mxu0 0
      %938 = vmatprep.subr.bf16.mxu0 0
      %939 = vmatpush1.bf16.msra.mxu0 %v855
      %940 = vmatprep.subr.bf16.mxu0 0
      %941 = vmatpush1.bf16.msra.mxu0 %v852
      %942 = vmatprep.subr.bf16.mxu0 0
      %943 = vmatpush2.bf16.msra.mxu0 0
      %944 = vmatprep.subr.bf16.mxu0 0
      %945 = vmatpush2.bf16.msra.mxu0 0
      %946 = vmatprep.subr.bf16.mxu0 0
      %947 = vmatpush2.bf16.msra.mxu0 0
      %948 = vmatprep.subr.bf16.mxu0 0
      %949 = vmatpush2.bf16.msra.mxu0 0
      %950 = vmatprep.subr.bf16.mxu0 0
      %951 = vmatpush2.bf16.msra.mxu0 0
      %952 = vmatprep.subr.bf16.mxu0 0
      %953 = vmatpush2.bf16.msra.mxu0 0
      %954 = vmatprep.subr.bf16.mxu0 0
      %955 = vmatpush2.bf16.msra.mxu0 0
      %956 = vmatprep.subr.bf16.mxu0 0
      %957 = vmatpush2.bf16.msra.mxu0 0
      %958 = vmatprep.mubr.bf16.mxu0 0
      %959 = vmatmul.mubr.bf16.gmra.mxu0 %v868
      %v960 = vpop.f32.mrf.mxu0
      %v961 = vadd.f32 0.0, %v960
      %v962 = vpop.f32.mrf.mxu0
      %v963 = vpop.f32.mrf.mxu0
      %v964 = vadd.f32 0.0, %v963
      %v965 = vpop.f32.mrf.mxu0
      %966 = vmatprep.mubr.bf16.mxu0 0
      %967 = vmatmul.mubr.bf16.gmra.mxu0 %v871
      %v968 = vpop.f32.mrf.mxu0
      %v969 = vadd.f32 0.0, %v968
      %v970 = vpop.f32.mrf.mxu0
      %v971 = vpop.f32.mrf.mxu0
      %v972 = vadd.f32 0.0, %v971
      %v973 = vpop.f32.mrf.mxu0
      %974 = vdwg.mxu0
      %v975 = vld [vmem:[#allocation2 + $0x60] sm:$0xff]
      %v976 = vld [vmem:[#allocation2 + $0x68] sm:$0xff]
      %v977 = vld [vmem:[#allocation2 + $0x70] sm:$0xff]
      %v978 = vld [vmem:[#allocation2 + $0x78] sm:$0xff]
      %v979 = vld [vmem:[#allocation2 + $0x80] sm:$0xff]
      %v980 = vld [vmem:[#allocation2 + $0x88] sm:$0xff]
      %v981 = vld [vmem:[#allocation2 + $0x90] sm:$0xff]
      %v982 = vld [vmem:[#allocation2 + $0x98] sm:$0xff]
      %v983 = vld [vmem:[#allocation2 + $0xa0] sm:$0xff]
      %v984 = vld [vmem:[#allocation2 + $0xa8] sm:$0xff]
      %v985 = vld [vmem:[#allocation2 + $0xb0] sm:$0xff]
      %v986 = vld [vmem:[#allocation2 + $0xb8] sm:$0xff]
      %v987 = vadd.f32 %v975, %v908
      %v988 = vadd.f32 %v976, %v910
      %v989 = vadd.f32 %v977, %v961
      %v990 = vadd.f32 %v978, %v912
      %v991 = vadd.f32 %v979, %v914
      %v992 = vadd.f32 %v980, %v964
      %v993 = vadd.f32 %v981, %v918
      %v994 = vadd.f32 %v982, %v920
      %v995 = vadd.f32 %v983, %v969
      %v996 = vadd.f32 %v984, %v922
      %v997 = vadd.f32 %v985, %v924
      %v998 = vadd.f32 %v986, %v972
      %vm999 = vcmp.le.f32.partialorder %v987, 0.01
      %vm1000 = vcmp.le.f32.partialorder %v988, 0.01
      %vm1001 = vcmp.le.f32.partialorder %v989, 0.01
      %vm1002 = vcmp.le.f32.partialorder %v990, 0.01
      %vm1003 = vcmp.le.f32.partialorder %v991, 0.01
      %vm1004 = vcmp.le.f32.partialorder %v992, 0.01
      %vm1005 = vcmp.le.f32.partialorder %v993, 0.01
      %vm1006 = vcmp.le.f32.partialorder %v994, 0.01
      %vm1007 = vcmp.le.f32.partialorder %v995, 0.01
      %vm1008 = vcmp.le.f32.partialorder %v996, 0.01
      %vm1009 = vcmp.le.f32.partialorder %v997, 0.01
      %vm1010 = vcmp.le.f32.partialorder %v998, 0.01
      %vm1011 = vcmp.le.f32.partialorder %v987, 0.0
      %vm1012 = vcmp.le.f32.partialorder %v988, 0.0
      %vm1013 = vcmp.le.f32.partialorder %v989, 0.0
      %vm1014 = vcmp.le.f32.partialorder %v990, 0.0
      %vm1015 = vcmp.le.f32.partialorder %v991, 0.0
      %vm1016 = vcmp.le.f32.partialorder %v992, 0.0
      %vm1017 = vcmp.le.f32.partialorder %v993, 0.0
      %vm1018 = vcmp.le.f32.partialorder %v994, 0.0
      %vm1019 = vcmp.le.f32.partialorder %v995, 0.0
      %vm1020 = vcmp.le.f32.partialorder %v996, 0.0
      %vm1021 = vcmp.le.f32.partialorder %v997, 0.0
      %vm1022 = vcmp.le.f32.partialorder %v998, 0.0
      %v1023 = vmul.f32 %v987, %v987
      %v1024 = vmul.f32 %v988, %v988
      %v1025 = vmul.f32 %v989, %v989
      %v1026 = vmul.f32 %v990, %v990
      %v1027 = vmul.f32 %v991, %v991
      %v1028 = vmul.f32 %v992, %v992
      %v1029 = vmul.f32 %v993, %v993
      %v1030 = vmul.f32 %v994, %v994
      %v1031 = vmul.f32 %v995, %v995
      %v1032 = vmul.f32 %v996, %v996
      %v1033 = vmul.f32 %v997, %v997
      %v1034 = vmul.f32 %v998, %v998
      %v1035 = vmul.f32 %v1023, %v797
      %v1036 = vmul.f32 %v1024, %v797
      %v1037 = vmul.f32 %v1025, %v797
      %v1038 = vmul.f32 %v1026, %v797
      %v1039 = vmul.f32 %v1027, %v797
      %v1040 = vmul.f32 %v1028, %v797
      %v1041 = vmul.f32 %v1029, %v797
      %v1042 = vmul.f32 %v1030, %v797
      %v1043 = vmul.f32 %v1031, %v797
      %v1044 = vmul.f32 %v1032, %v797
      %v1045 = vmul.f32 %v1033, %v797
      %v1046 = vmul.f32 %v1034, %v797
      %v1047 = vsel %vm1011, 0.0, %v1035
      %v1048 = vsel %vm1012, 0.0, %v1036
      %v1049 = vsel %vm1013, 0.0, %v1037
      %v1050 = vsel %vm1014, 0.0, %v1038
      %v1051 = vsel %vm1015, 0.0, %v1039
      %v1052 = vsel %vm1016, 0.0, %v1040
      %v1053 = vsel %vm1017, 0.0, %v1041
      %v1054 = vsel %vm1018, 0.0, %v1042
      %v1055 = vsel %vm1019, 0.0, %v1043
      %v1056 = vsel %vm1020, 0.0, %v1044
      %v1057 = vsel %vm1021, 0.0, %v1045
      %v1058 = vsel %vm1022, 0.0, %v1046
      %v1059 = vsub.f32 %v987, 0.005
      %v1060 = vsub.f32 %v988, 0.005
      %v1061 = vsub.f32 %v989, 0.005
      %v1062 = vsub.f32 %v990, 0.005
      %v1063 = vsub.f32 %v991, 0.005
      %v1064 = vsub.f32 %v992, 0.005
      %v1065 = vsub.f32 %v993, 0.005
      %v1066 = vsub.f32 %v994, 0.005
      %v1067 = vsub.f32 %v995, 0.005
      %v1068 = vsub.f32 %v996, 0.005
      %v1069 = vsub.f32 %v997, 0.005
      %v1070 = vsub.f32 %v998, 0.005
      %v1071 = vsel %vm999, %v1047, %v1059
      %v1072 = vsel %vm1000, %v1048, %v1060
      %v1073 = vsel %vm1001, %v1049, %v1061
      %v1074 = vsel %vm1002, %v1050, %v1062
      %v1075 = vsel %vm1003, %v1051, %v1063
      %v1076 = vsel %vm1004, %v1052, %v1064
      %v1077 = vsel %vm1005, %v1053, %v1065
      %v1078 = vsel %vm1006, %v1054, %v1066
      %v1079 = vsel %vm1007, %v1055, %v1067
      %v1080 = vsel %vm1008, %v1056, %v1068
      %v1081 = vsel %vm1009, %v1057, %v1069
      %v1082 = vsel %vm1010, %v1058, %v1070
      %v1083 = vld [vmem:[%s4] sm:$0x1]
      %v1084 = vpack.c.bf16 %v1074, %v1071
      %v1085 = vpack.c.bf16 %v1075, %v1072
      %v1086 = vpack.c.bf16 %v1076, %v1073
      %v1087 = vpack.c.bf16 %v1080, %v1077
      %v1088 = vpack.c.bf16 %v1081, %v1078
      %v1089 = vpack.c.bf16 %v1082, %v1079
      %v1091 = vsel %vm866, %v1083, 0
      %1093 = vmatprep.subr.bf16.mxu0 0
      %1094 = vmatpush1.bf16.msra.mxu0 0
      %1095 = vmatprep.subr.bf16.mxu0 0
      %1096 = vmatpush1.bf16.msra.mxu0 0
      %1097 = vmatprep.subr.bf16.mxu0 0
      %1098 = vmatpush1.bf16.msra.mxu0 0
      %1099 = vmatprep.subr.bf16.mxu0 0
      %1100 = vmatpush1.bf16.msra.mxu0 0
      %1101 = vmatprep.subr.bf16.mxu0 0
      %1102 = vmatpush1.bf16.msra.mxu0 0
      %1103 = vmatprep.subr.bf16.mxu0 0
      %1104 = vmatpush1.bf16.msra.mxu0 0
      %1105 = vmatprep.subr.bf16.mxu0 %v1088
      %1106 = vmatpush1.bf16.msra.mxu0 %v1087
      %1107 = vmatprep.subr.bf16.mxu0 %v1085
      %1108 = vmatpush1.bf16.msra.mxu0 %v1084
      %1109 = vmatprep.subr.bf16.mxu0 0
      %1110 = vmatpush2.bf16.msra.mxu0 0
      %1111 = vmatprep.subr.bf16.mxu0 0
      %1112 = vmatpush2.bf16.msra.mxu0 0
      %1113 = vmatprep.subr.bf16.mxu0 0
      %1114 = vmatpush2.bf16.msra.mxu0 0
      %1115 = vmatprep.subr.bf16.mxu0 0
      %1116 = vmatpush2.bf16.msra.mxu0 0
      %1117 = vmatprep.subr.bf16.mxu0 0
      %1118 = vmatpush2.bf16.msra.mxu0 0
      %1119 = vmatprep.subr.bf16.mxu0 0
      %1120 = vmatpush2.bf16.msra.mxu0 0
      %1121 = vmatprep.subr.bf16.mxu0 0
      %1122 = vmatpush2.bf16.msra.mxu0 0
      %1123 = vmatprep.subr.bf16.mxu0 0
      %1124 = vmatpush2.bf16.msra.mxu0 0
      %1125 = vmatprep.mubr.bf16.mxu0 0
      %1126 = vmatmul.mubr.bf16.gmra.mxu0 %v1091
      %v1127 = vpop.f32.mrf.mxu0
      %v1128 = vadd.f32 0.0, %v1127
      %v1129 = vpop.f32.mrf.mxu0
      %v1130 = vadd.f32 0.0, %v1129
      %v1131 = vpop.f32.mrf.mxu0
      %v1132 = vpop.f32.mrf.mxu0
      %1133 = vdwg.mxu0
      %1134 = vmatprep.subr.bf16.mxu0 0
      %1135 = vmatpush1.bf16.msra.mxu0 0
      %1136 = vmatprep.subr.bf16.mxu0 0
      %1137 = vmatpush1.bf16.msra.mxu0 0
      %1138 = vmatprep.subr.bf16.mxu0 0
      %1139 = vmatpush1.bf16.msra.mxu0 0
      %1140 = vmatprep.subr.bf16.mxu0 0
      %1141 = vmatpush1.bf16.msra.mxu0 0
      %1142 = vmatprep.subr.bf16.mxu0 0
      %1143 = vmatpush1.bf16.msra.mxu0 0
      %1144 = vmatprep.subr.bf16.mxu0 0
      %1145 = vmatpush1.bf16.msra.mxu0 0
      %1146 = vmatprep.subr.bf16.mxu0 0
      %1147 = vmatpush1.bf16.msra.mxu0 %v1089
      %1148 = vmatprep.subr.bf16.mxu0 0
      %1149 = vmatpush1.bf16.msra.mxu0 %v1086
      %1150 = vmatprep.subr.bf16.mxu0 0
      %1151 = vmatpush2.bf16.msra.mxu0 0
      %1152 = vmatprep.subr.bf16.mxu0 0
      %1153 = vmatpush2.bf16.msra.mxu0 0
      %1154 = vmatprep.subr.bf16.mxu0 0
      %1155 = vmatpush2.bf16.msra.mxu0 0
      %1156 = vmatprep.subr.bf16.mxu0 0
      %1157 = vmatpush2.bf16.msra.mxu0 0
      %1158 = vmatprep.subr.bf16.mxu0 0
      %1159 = vmatpush2.bf16.msra.mxu0 0
      %1160 = vmatprep.subr.bf16.mxu0 0
      %1161 = vmatpush2.bf16.msra.mxu0 0
      %1162 = vmatprep.subr.bf16.mxu0 0
      %1163 = vmatpush2.bf16.msra.mxu0 0
      %1164 = vmatprep.subr.bf16.mxu0 0
      %1165 = vmatpush2.bf16.msra.mxu0 0
      %1166 = vmatprep.mubr.bf16.mxu0 0
      %1167 = vmatmul.mubr.bf16.gmra.mxu0 %v1091
      %v1168 = vpop.f32.mrf.mxu0
      %v1169 = vadd.f32 0.0, %v1168
      %v1170 = vpop.f32.mrf.mxu0
      %v1171 = vpop.f32.mrf.mxu0
      %v1172 = vpop.f32.mrf.mxu0
      %1173 = vdwg.mxu0
      %s1174 = scalar_lea.vmem [#allocation2], 192
      %v1175 = vld [vmem:[%s1174] ss:$8 sm:$0x7]
      %v1179 = vcombine.low %v1128, %v1130
      %v1181 = vunpack.c.l.s4 1966171168
      %v1182 = vunpack.c.0.s8 %v1181
      %v1183 = vlaneseq
      %v1184 = vshrl.u32 %v1183, 7
      %v1185 = vsub.s32 %v1182, %v1184
      %v1186 = vrot.slane %v1179, %v1185
      %v1188 = vunpack.c.l.s4 1966171168
      %v1189 = vunpack.c.0.s8 %v1188
      %v1190 = vlaneseq
      %v1191 = vshrl.u32 %v1190, 7
      %v1192 = vsub.s32 %v1189, %v1191
      %v1193 = vrot.slane %v1169, %v1192
      %v1194 = vcombine.low %v1186, %v1193
      %v1196 = vunpack.c.l.s4 1966171168
      %v1197 = vunpack.c.0.s8 %v1196
      %v1198 = vlaneseq
      %v1199 = vshrl.u32 %v1198, 7
      %v1200 = vsub.s32 %v1197, %v1199
      %v1201 = vrot.slane %v1194, %v1200
      %v1203 = vadd.f32 %v1175, %v1201
      %vm1204 = vcmp.le.f32.partialorder %v1203, 0.01
      %vm1205 = vcmp.le.f32.partialorder %v1203, 0.0
      %v1206 = vmul.f32 %v1203, %v1203
      %v1207 = vmul.f32 %v1206, %v797
      %v1208 = vsel %vm1205, 0.0, %v1207
      %v1209 = vsub.f32 %v1203, 0.005
      %v1210 = vsel %vm1204, %v1208, %v1209
      %v1211 = vlaneseq
      %vm1212 = vcmp.ge.s32.totalorder %v1211, 0
      %vm1213 = vcmp.lt.s32.totalorder %v1211, 384
      %vm1214 = vmand %vm1212, %vm1213
      %1215 = vst.msk [vmem:[%s224] sm:$0x7] %vm1214, %v1210
      %s1216 = smul.u32 3, %s16
      %p1217 = scmp.lt.s32.totalorder %s1216, 5
      %s1218 = scalar_select %p1217, %s1216, 5
      %s1219 = scalar_lea.vmem %s5, %s1218
      // Predicated region
      $region41: #{icnn_forward.1} parent=39 // pred_check
        %p1220 = pneg %p144
      $region42: #{icnn_forward.1} parent=39 // pred_check_branch
        %1222 = sbr.rel (%p1220) target = $region44
      $region43: #{icnn_forward.1} parent=39 // pred_region
        %s1223 = smul.u32 3, %s16
      $region44: #{icnn_forward.1} parent=39 // pred_fallthru
        _
    $region40: #{icnn_forward.1} parent=5 // pred_fallthru
      _
    %p1224 = scmp.le.s32.totalorder 2, %s11
    // Predicated region
    $region45: #{icnn_forward.1} parent=5 // pred_check
      %p1225 = pneg %p1224
    $region46: #{icnn_forward.1} parent=5 // pred_check_branch
      %1227 = sbr.rel (%p1225) target = $region48
    $region47: #{icnn_forward.1} parent=5 // pred_region
      %s1228 = ssub.s32 %s11, 2
      // Predicated region
      $region49: #{icnn_forward.1} parent=47 // pred_check
        %p1229 = pneg %p150
      $region50: #{icnn_forward.1} parent=47 // pred_check_branch
        %1231 = sbr.rel (%p1229) target = $region52
      $region51: #{icnn_forward.1} parent=47 // pred_region
        %s1232 = smul.u32 3, %s17
        %p1233 = scmp.lt.s32.totalorder %s1232, 5
        %s1234 = scalar_select %p1233, %s1232, 5
        %s1235 = scalar_lea.vmem %s5, %s1234
      $region52: #{icnn_forward.1} parent=47 // pred_fallthru
        _
    $region48: #{icnn_forward.1} parent=5 // pred_fallthru
      _
  $region6: #{icnn_forward.1} parent=0 // loop_footer
    %s15 = sadd.s32 1, %s11
  $region7: #{icnn_forward.1} parent=0 // loop_footer_branch
    %10 = sbr.rel target = $region3
  $region8: #{icnn_forward.1} parent=0 // loop_exit
    _

</llo_original>
